<compile_context>
chip_gen: v6e
topology: v6e:2x2x1
jax: 0.10.0
libtpu: 0.0.40
codegen_flags: <defaults>
</compile_context>

<pallas_src>
import numpy as np

import jax
import jax.numpy as jnp
from jax.experimental import pallas as pl
from jax.experimental.pallas import tpu as pltpu

KH = KW = 3   # fixed 3x3 conv
PAD = 1       # padding=1


def conv_matmul_kernel(x_ref, m_ref, o_ref):
    """out = x_aug @ M_aug  (offset folded in via constant-1 column / extra row).

    x_ref: (N, Cin*H*W + 1)            flattened NCHW input + ones column, f32
    m_ref: (Cin*H*W + 1, Cout*H*W)     conv-as-matrix with offset row appended
    o_ref: (N, Cout*H*W)               flattened NCHW output, f32
    """
    o_ref[...] = jnp.dot(x_ref[...], m_ref[...],
                         preferred_element_type=jnp.float32)


def _conv_weight_to_matrix_np(weight_oihw, h, w):
    """Host-side (NumPy) Toeplitz construction, done once off the hot path.

    M[(ci,hi,wi), (co,ho,wo)] = weight[co, ci, hi-ho+PAD, wi-wo+PAD], zero when
    the tap falls outside the kernel window (== the conv's zero padding)."""
    weight_oihw = np.asarray(weight_oihw, dtype=np.float32)
    cout, cin, kh_sz, kw_sz = weight_oihw.shape
    m = np.zeros((cin, h, w, cout, h, w), dtype=np.float32)
    for co in range(cout):
        for ci in range(cin):
            for ho in range(h):
                for wo in range(w):
                    for kh in range(kh_sz):
                        for kw in range(kw_sz):
                            hi = ho + kh - PAD
                            wi = wo + kw - PAD
                            if 0 <= hi < h and 0 <= wi < w:
                                m[ci, hi, wi, co, ho, wo] = weight_oihw[co, ci, kh, kw]
    return m.reshape(cin * h * w, cout * h * w)


def build_model_forward(weight_oihw, bias, h, w):
    """Factory: precompute the conv-as-matrix constant, return a jitted forward
    taking (x_nchw, noise_nchw) -- the per-call activation path only."""
    weight_np = np.asarray(weight_oihw, dtype=np.float32)
    bias_np = np.asarray(bias, dtype=np.float32)
    cout, cin = weight_np.shape[0], weight_np.shape[1]
    k = cin * h * w            # 27
    p = cout * h * w           # 27

    m_const = jnp.asarray(_conv_weight_to_matrix_np(weight_np, h, w))   # (k, p)
    bias_col = jnp.asarray(bias_np).reshape(1, cout, 1, 1)

    @jax.jit
    def forward(x_nchw, noise_nchw):
        n = x_nchw.shape[0]
        # Per-call offset (bias - noise), appended as an extra row of M.
        offset = (bias_col - noise_nchw.astype(jnp.float32)).reshape(1, p)
        m_aug = jnp.concatenate([m_const, offset], axis=0)              # (k+1, p)
        # Activation path: contiguous reshape + ones column (no pad/transpose).
        x2d = x_nchw.astype(jnp.float32).reshape(n, k)
        x_aug = jnp.concatenate([x2d, jnp.ones((n, 1), jnp.float32)], axis=1)

        out2d = pl.pallas_call(
            conv_matmul_kernel,
            out_shape=jax.ShapeDtypeStruct((n, p), jnp.float32),
            in_specs=[pl.BlockSpec(memory_space=pltpu.MemorySpace.VMEM)] * 2,
            out_specs=pl.BlockSpec(memory_space=pltpu.MemorySpace.VMEM),
            cost_estimate=pl.CostEstimate(
                flops=2 * n * (k + 1) * p,
                bytes_accessed=(n * (k + 1) + (k + 1) * p + n * p) * 4,
                transcendentals=0),
        )(x_aug, m_aug)

        return out2d.reshape(n, cout, h, w)   # back to NCHW (free reshape)

    return forward


if __name__ == "__main__":
    key = jax.random.PRNGKey(0)
    k_x, k_w, k_b, k_n = jax.random.split(key, 4)

    # Small shapes consistent with the module: Conv2d(3, 3, 3, padding=1),
    # spatial = 3 so the (1,3,3,3) subtraction broadcasts; batch = 2.
    N, C, H, W = 2, 3, 3, 3
    x = jax.random.normal(k_x, (N, C, H, W), jnp.float32)             # NCHW
    weight = jax.random.normal(k_w, (3, 3, 3, 3), jnp.float32) * 0.2  # OIHW
    bias = jax.random.normal(k_b, (3,), jnp.float32) * 0.1
    noise = jax.random.normal(k_n, (1, 3, 3, 3), jnp.float32)         # like torch.randn

    fwd = build_model_forward(weight, bias, H, W)
    out = jax.block_until_ready(fwd(x, noise))

    # Reference check (plain XLA conv) to validate the Pallas kernel.
    # Tolerance slightly loosened: the in-kernel MXU dot uses default f32
    # precision (bf16-pass decomposition) vs. Precision.HIGHEST reference.
    ref = jax.lax.conv_general_dilated(
        x, weight, window_strides=(1, 1), padding="SAME",
        dimension_numbers=("NCHW", "OIHW", "NCHW"),
        precision=jax.lax.Precision.HIGHEST,
    ) + bias.reshape(1, -1, 1, 1) - noise
    assert out.shape == (N, C, H, W)
    assert jnp.allclose(out, ref, atol=1e-3, rtol=1e-3)

    print("KERNEL_OK")
</pallas_src>

<mosaic_0001>
module attributes {stable_mosaic.version = 11 : i64} {
  func.func @conv_matmul_kernel(%arg0: memref<2x28xf32, #tpu.memory_space<vmem>>, %arg1: memref<28x27xf32, #tpu.memory_space<vmem>>, %arg2: memref<2x27xf32, #tpu.memory_space<vmem>>) attributes {dimension_semantics = [], scalar_prefetch = 0 : i64, scratch_operands = 0 : i64, tpu.core_type = #tpu.core_type<tc>} {
    %c0 = arith.constant 0 : index
    %c0_0 = arith.constant 0 : index
    %0 = vector.load %arg0[%c0, %c0_0] : memref<2x28xf32, #tpu.memory_space<vmem>>, vector<2x28xf32>
    %c0_1 = arith.constant 0 : index
    %c0_2 = arith.constant 0 : index
    %1 = vector.load %arg1[%c0_1, %c0_2] : memref<28x27xf32, #tpu.memory_space<vmem>>, vector<28x27xf32>
    %cst = arith.constant dense<0.000000e+00> : vector<2x27xf32>
    %2 = tpu.matmul %0, %1, %cst {dimension_numbers = #tpu.dot_dimension_numbers<[1], [0], [0], [1], [0, 0, 1, 1], [], []>} : vector<2x28xf32>, vector<28x27xf32>, vector<2x27xf32> -> vector<2x27xf32>
    %c0_3 = arith.constant 0 : index
    %c0_4 = arith.constant 0 : index
    %3 = vector.load %arg2[%c0_3, %c0_4] : memref<2x27xf32, #tpu.memory_space<vmem>>, vector<2x27xf32>
    tpu.vector_store %arg2[%c0_3, %c0_4], %2 {strides = array<i32>} : memref<2x27xf32, #tpu.memory_space<vmem>>, vector<2x27xf32>,
    return
  }
}

</mosaic_0001>

<llo_original>
// kernel: forward.1
$region0: #{forward.1}
  #allocation0 [shape = 'u32[]', space=smem, size = 0x4, offset = 0x4, fixed_abs, tag = 'smem constant byte address 0x4 - core index']
  #allocation1 [shape = 'u32[144,128]{1,0:T(1,128)}', space=vmem, size = 0x12000, scoped, tag = 'internal scratch']
  %s0 = inlined_call_operand.vmem [shape: f32[2,28], index: 0, kind: input, shape index: {}]
  %s1 = inlined_call_operand.vmem [shape: f32[28,27], index: 1, kind: input, shape index: {}]
  %s2 = inlined_call_operand.vmem [shape: f32[2,27], index: 2, kind: output, shape index: {}]
  %s3 = sld [smem:[#allocation0]]
  $region18: #{forward.1} parent=0
    _
  %s5 = ssub.s32 1, %s3
  %s6 = scalar_select 0, %s5, %s3
  // Predicated region
  $region2: #{forward.1} parent=0 // pred_check
    _
  $region3: #{forward.1} parent=0 // pred_check_branch
    %8 = sbr.rel (0) target = $region5
  $region4: #{forward.1} parent=0 // pred_region
    _
  $region5: #{forward.1} parent=0 // pred_fallthru
    _
  // Predicated region
  $region6: #{forward.1} parent=0 // pred_check
    _
  $region7: #{forward.1} parent=0 // pred_check_branch
    %10 = sbr.rel (0) target = $region9
  $region8: #{forward.1} parent=0 // pred_region
    _
  $region9: #{forward.1} parent=0 // pred_fallthru
    _
  %v11 = vld [vmem:[%s0] sm:$0x3]
  %v12 = vld [vmem:[%s1] sm:$0xff]
  %v13 = vld [vmem:[%s1 + $0x8] sm:$0xff]
  %v14 = vld [vmem:[%s1 + $0x10] sm:$0xff]
  %v15 = vld [vmem:[%s1 + $0x18] sm:$0xf]
  %vm16 = vcmask 228352
  %v18 = vsel %vm16, %v11, 0
  %vm20 = vcmask 1043456
  %v22 = vsel %vm20, %v15, 0
  %24 = vmatprep.subr.mxu0 0.0
  %25 = vmatpush1.msra.mxu0 0.0
  %26 = vmatprep.subr.mxu0 0.0
  %27 = vmatpush1.msra.mxu0 0.0
  %28 = vmatprep.subr.mxu0 0.0
  %29 = vmatpush1.msra.mxu0 0.0
  %30 = vmatprep.subr.mxu0 0.0
  %31 = vmatpush1.msra.mxu0 0.0
  %32 = vmatprep.subr.mxu0 0.0
  %33 = vmatpush1.msra.mxu0 0.0
  %34 = vmatprep.subr.mxu0 0.0
  %35 = vmatpush1.msra.mxu0 0.0
  %36 = vmatprep.subr.mxu0 0.0
  %37 = vmatpush1.msra.mxu0 0.0
  %38 = vmatprep.subr.mxu0 0.0
  %39 = vmatpush1.msra.mxu0 0.0
  %40 = vmatprep.subr.mxu0 0.0
  %41 = vmatpush1.msra.mxu0 0.0
  %42 = vmatprep.subr.mxu0 0.0
  %43 = vmatpush1.msra.mxu0 0.0
  %44 = vmatprep.subr.mxu0 0.0
  %45 = vmatpush1.msra.mxu0 0.0
  %46 = vmatprep.subr.mxu0 0.0
  %47 = vmatpush1.msra.mxu0 0.0
  %48 = vmatprep.subr.mxu0 0.0
  %49 = vmatpush1.msra.mxu0 %v22
  %50 = vmatprep.subr.mxu0 0.0
  %51 = vmatpush1.msra.mxu0 %v14
  %52 = vmatprep.subr.mxu0 0.0
  %53 = vmatpush1.msra.mxu0 %v13
  %54 = vmatprep.subr.mxu0 0.0
  %55 = vmatpush1.msra.mxu0 %v12
  %56 = vmatprep.subr.mxu0 0.0
  %57 = vmatpush2.msra.mxu0 0.0
  %58 = vmatprep.subr.mxu0 0.0
  %59 = vmatpush2.msra.mxu0 0.0
  %60 = vmatprep.subr.mxu0 0.0
  %61 = vmatpush2.msra.mxu0 0.0
  %62 = vmatprep.subr.mxu0 0.0
  %63 = vmatpush2.msra.mxu0 0.0
  %64 = vmatprep.subr.mxu0 0.0
  %65 = vmatpush2.msra.mxu0 0.0
  %66 = vmatprep.subr.mxu0 0.0
  %67 = vmatpush2.msra.mxu0 0.0
  %68 = vmatprep.subr.mxu0 0.0
  %69 = vmatpush2.msra.mxu0 0.0
  %70 = vmatprep.subr.mxu0 0.0
  %71 = vmatpush2.msra.mxu0 0.0
  %72 = vmatprep.subr.mxu0 0.0
  %73 = vmatpush2.msra.mxu0 0.0
  %74 = vmatprep.subr.mxu0 0.0
  %75 = vmatpush2.msra.mxu0 0.0
  %76 = vmatprep.subr.mxu0 0.0
  %77 = vmatpush2.msra.mxu0 0.0
  %78 = vmatprep.subr.mxu0 0.0
  %79 = vmatpush2.msra.mxu0 0.0
  %80 = vmatprep.subr.mxu0 0.0
  %81 = vmatpush2.msra.mxu0 0.0
  %82 = vmatprep.subr.mxu0 0.0
  %83 = vmatpush2.msra.mxu0 0.0
  %84 = vmatprep.subr.mxu0 0.0
  %85 = vmatpush2.msra.mxu0 0.0
  %86 = vmatprep.subr.mxu0 0.0
  %87 = vmatpush2.msra.mxu0 0.0
  %88 = vmatprep.mubr.f32.mxu0 0.0
  %89 = vmatmul.mubr.f32.gmra.mxu0 %v18
  %v90 = vpop.f32.mrf.mxu0
  %v91 = vadd.f32 0.0, %v90
  %v92 = vpop.f32.mrf.mxu0
  %93 = vdwg.mxu0
  %vm94 = vcmask 214016
  %95 = vst.msk [vmem:[%s2] sm:$0x3] %vm94, %v91
  // Predicated region
  $region10: #{forward.1} parent=0 // pred_check
    _
  $region11: #{forward.1} parent=0 // pred_check_branch
    %97 = sbr.rel (0) target = $region13
  $region12: #{forward.1} parent=0 // pred_region
    _
  $region13: #{forward.1} parent=0 // pred_fallthru
    _
  // Predicated region
  $region14: #{forward.1} parent=0 // pred_check
    _
  $region15: #{forward.1} parent=0 // pred_check_branch
    %99 = sbr.rel (0) target = $region17
  $region16: #{forward.1} parent=0 // pred_region
    _
  $region17: #{forward.1} parent=0 // pred_fallthru
    _

</llo_original>
